<compile_context>
chip_gen: v5e
topology: v5e:2x2
jax: 0.10.0
libtpu: 0.0.40
codegen_flags: <defaults>
</compile_context>

<pallas_src>
import numpy as np
import jax
import jax.numpy as jnp
from jax.experimental import pallas as pl
from jax.experimental.pallas import tpu as pltpu

# ----------------------------- configuration --------------------------------
B = 2            # batch
N_GROUP = 8      # H (causal conv dim, "n_group")
T = 16           # time dim
N_COND = 8       # conditioning (mel) channels
N_CHANNELS = 8   # WN hidden channels (must be even)
N_LAYERS = 2
KW = 3           # kernel_size_w (odd)
KH = 2           # kernel_size_h
DIL_H = [1] * N_LAYERS
DIL_W = [2 ** i for i in range(N_LAYERS)]
PAD_H = [(KH - 1) * DIL_H[i] for i in range(N_LAYERS)]            # causal H pad
PAD_W = [(KW - 1) * DIL_W[i] // 2 for i in range(N_LAYERS)]       # same W pad
HT = N_GROUP * T
BHT = B * HT                                                      # 256 lanes
N_TAPS = KH * KW


# ------------------------------- the kernel ---------------------------------
def wn2d_kernel(audio_ref, spect_ref, mask_ref, start_w_ref, start_b_ref,
                cond_w_ref, cond_b_ref, in_w_ref, rs_w_ref, rs_b_ref,
                end_w_ref, end_b_ref, out_ref):
    nc = N_CHANNELS

    # ---- start: Conv2d(1, nc, (1,1)) as a lane-dense broadcast mul-add ----
    a = audio_ref[...]                                        # [1, BHT]
    x = start_w_ref[...] * a + start_b_ref[...]               # [nc, BHT]

    # ---- cond: Conv1d(N_COND, 2*nc*n_layers, k=1) as one MXU matmul ----
    #      (per-layer in_layer bias is pre-folded into cond_b by the wrapper)
    cond = jnp.dot(cond_w_ref[...], spect_ref[...],
                   preferred_element_type=jnp.float32) + cond_b_ref[...]
    # cond: [2*nc*N_LAYERS, BHT]

    output = None
    for i in range(N_LAYERS):
        dh, dw = DIL_H[i], DIL_W[i]
        ph, pw = PAD_H[i], PAD_W[i]

        # im2col: KH*KW shifted+masked copies of x, stacked on sublanes.
        # Flat index f = b*H*T + h*T + t; tap (p,q) reads x[h+p*dh-ph, t+q*dw-pw]
        # == lane shift by s = (p*dh-ph)*T + (q*dw-pw); out-of-range (zero-pad /
        # batch-boundary) positions are killed by a precomputed 0/1 mask.
        cols = []
        for p in range(KH):
            for q in range(KW):
                dh_off = p * dh - ph            # <= 0 (causal in H)
                dt_off = q * dw - pw            # symmetric in T
                s = dh_off * T + dt_off
                win = x if s == 0 else pltpu.roll(x, (-s) % BHT, axis=1)
                if not (dh_off == 0 and dt_off == 0):
                    win = win * mask_ref[i * N_TAPS + p * KW + q]   # [1,BHT]
                cols.append(win)
        xcol = jnp.concatenate(cols, axis=0)                  # [KH*KW*nc, BHT]

        # dilated Conv2d(nc, 2nc, (KH,KW)) as a single K=KH*KW*nc MXU matmul
        acts = jnp.dot(in_w_ref[i], xcol,
                       preferred_element_type=jnp.float32)    # [2nc, BHT]
        acts = acts + cond[i * 2 * nc:(i + 1) * 2 * nc, :]

        # gated unit (GTU): tanh * sigmoid (sigmoid -> EUP)
        gated = jnp.tanh(acts[:nc, :]) * jax.nn.sigmoid(acts[nc:, :])  # [nc,BHT]

        # res_skip 1x1 conv (last layer zero-padded to 2nc rows by the wrapper)
        rs = jnp.dot(rs_w_ref[i], gated,
                     preferred_element_type=jnp.float32) + rs_b_ref[i]  # [2nc,BHT]
        if i < N_LAYERS - 1:
            x = x + rs[:nc, :]               # residual
            skip = rs[nc:, :]                # skip
        else:
            skip = rs[:nc, :]                # last layer: skip only
        output = skip if output is None else output + skip

    # ---- end: Conv2d(nc, 2, (1,1)) -> lane-dense [2, BHT] store ----
    out_ref[...] = (jnp.dot(end_w_ref[...], output,
                            preferred_element_type=jnp.float32)
                    + end_b_ref[...])


# ------------------------------ JAX wrapper ----------------------------------
def init_params(key):
    """PyTorch-convention parameter shapes (weight_norm at init == plain conv)."""
    nc, nl = N_CHANNELS, N_LAYERS
    ks = jax.random.split(key, 16)
    p = {}
    p['start_w'] = jax.random.normal(ks[0], (nc, 1, 1, 1), jnp.float32) * 0.5
    p['start_b'] = jax.random.normal(ks[1], (nc,), jnp.float32) * 0.1
    p['cond_w'] = jax.random.normal(ks[2], (2 * nc * nl, N_COND, 1), jnp.float32) * 0.2
    p['cond_b'] = jax.random.normal(ks[3], (2 * nc * nl,), jnp.float32) * 0.1
    p['in_w'], p['in_b'], p['rs_w'], p['rs_b'] = [], [], [], []
    for i in range(nl):
        p['in_w'].append(jax.random.normal(ks[4 + i], (2 * nc, nc, KH, KW), jnp.float32) * 0.2)
        p['in_b'].append(jax.random.normal(ks[6 + i], (2 * nc,), jnp.float32) * 0.1)
        rsc = 2 * nc if i < nl - 1 else nc
        p['rs_w'].append(jax.random.normal(ks[8 + i], (rsc, nc, 1, 1), jnp.float32) * 0.2)
        p['rs_b'].append(jax.random.normal(ks[10 + i], (rsc,), jnp.float32) * 0.1)
    # NOTE: WN_2d.__init__ zero-initialises `end`; use non-zero values here so
    # the synthetic test output is non-trivial.
    p['end_w'] = jax.random.normal(ks[12], (2, nc, 1, 1), jnp.float32) * 0.2
    p['end_b'] = jax.random.normal(ks[13], (2,), jnp.float32) * 0.1
    return p


def build_tap_masks():
    """0/1 masks (numpy, static) for each conv tap in the flat [B*H*T] layout."""
    f = np.arange(BHT)
    h = (f // T) % N_GROUP
    t = f % T
    masks = np.zeros((N_LAYERS * N_TAPS, 1, BHT), np.float32)
    for i in range(N_LAYERS):
        for p in range(KH):
            for q in range(KW):
                dh_off = p * DIL_H[i] - PAD_H[i]
                dt_off = q * DIL_W[i] - PAD_W[i]
                valid = ((h + dh_off >= 0) & (h + dh_off < N_GROUP) &
                         (t + dt_off >= 0) & (t + dt_off < T))
                masks[i * N_TAPS + p * KW + q, 0] = valid.astype(np.float32)
    return jnp.asarray(masks)


def prepare_kernel_params(p):
    """Reshape PyTorch-convention weights into the lane-dense kernel layout."""
    nc, nl = N_CHANNELS, N_LAYERS
    kp = {}
    kp['start_w'] = p['start_w'][:, 0, 0, 0].reshape(nc, 1)
    kp['start_b'] = p['start_b'].reshape(nc, 1)
    kp['cond_w'] = p['cond_w'][:, :, 0]                                  # [2nc*nl, N_COND]
    # fold per-layer in_layer bias into the cond bias (both broadcast identically)
    in_b_all = jnp.concatenate([p['in_b'][i] for i in range(nl)])
    kp['cond_b'] = (p['cond_b'] + in_b_all).reshape(2 * nc * nl, 1)
    # im2col weights: [nl, 2nc, KH*KW*nc], column order = tap-major then channel
    in_ws = []
    for i in range(nl):
        w = jnp.transpose(p['in_w'][i], (0, 2, 3, 1)).reshape(2 * nc, KH * KW * nc)
        in_ws.append(w)
    kp['in_w'] = jnp.stack(in_ws)
    rs_ws, rs_bs = [], []
    for i in range(nl):
        w = p['rs_w'][i][:, :, 0, 0]                                     # [rsc, nc]
        bvec = p['rs_b'][i]
        if w.shape[0] < 2 * nc:                                          # pad last layer
            w = jnp.pad(w, ((0, 2 * nc - w.shape[0]), (0, 0)))
            bvec = jnp.pad(bvec, (0, 2 * nc - bvec.shape[0]))
        rs_ws.append(w)
        rs_bs.append(bvec.reshape(2 * nc, 1))
    kp['rs_w'] = jnp.stack(rs_ws)                                        # [nl, 2nc, nc]
    kp['rs_b'] = jnp.stack(rs_bs)                                        # [nl, 2nc, 1]
    kp['end_w'] = p['end_w'][:, :, 0, 0]                                 # [2, nc]
    kp['end_b'] = p['end_b'].reshape(2, 1)
    return kp


def wn2d_forward(audio, spect, params):
    """audio: [B, n_group, T], spect: [B, N_COND, T] -> [2, B, n_group, T]."""
    kp = prepare_kernel_params(params)
    tap_mask = build_tap_masks()
    audio_flat = audio.reshape(1, BHT)                       # [1, B*H*T]
    # cond is a 1x1 conv over T broadcast along H; pre-expand mel along H so the
    # kernel's cond matmul lands directly in the lane-dense [*, B*H*T] layout.
    spect_exp = jnp.broadcast_to(
        jnp.transpose(spect, (1, 0, 2))[:, :, None, :],
        (N_COND, B, N_GROUP, T)).reshape(N_COND, BHT)        # [N_COND, B*H*T]

    args = (audio_flat, spect_exp, tap_mask, kp['start_w'], kp['start_b'],
            kp['cond_w'], kp['cond_b'], kp['in_w'], kp['rs_w'], kp['rs_b'],
            kp['end_w'], kp['end_b'])
    out = pl.pallas_call(
        wn2d_kernel,
        out_shape=jax.ShapeDtypeStruct((2, BHT), jnp.float32),
        in_specs=[pl.BlockSpec(memory_space=pltpu.MemorySpace.VMEM)] * len(args),
        out_specs=pl.BlockSpec(memory_space=pltpu.MemorySpace.VMEM),
    )(*args)
    # [2, B*H*T] -> [2, B, H, T]  == PyTorch `self.end(output).transpose(1, 0)`
    return out.reshape(2, B, N_GROUP, T)


# ------------------------- pure-JAX reference (NCHW) -------------------------
def wn2d_reference(audio, spect, p):
    nc = N_CHANNELS
    hi = jax.lax.Precision.HIGHEST
    a4 = audio[:, None, :, :]                                            # [B,1,H,T]
    x = (p['start_w'][:, 0, 0, 0][None, :, None, None] * a4
         + p['start_b'][None, :, None, None])                           # [B,nc,H,T]
    cond = jnp.einsum('oi,bit->bot', p['cond_w'][:, :, 0], spect,
                      precision=hi) + p['cond_b'][None, :, None]
    output = jnp.zeros_like(x)
    for i in range(N_LAYERS):
        xpad = jnp.pad(x, ((0, 0), (0, 0), (PAD_H[i], 0), (0, 0)))
        acts = jax.lax.conv_general_dilated(
            xpad, p['in_w'][i], window_strides=(1, 1),
            padding=((0, 0), (PAD_W[i], PAD_W[i])),
            rhs_dilation=(DIL_H[i], DIL_W[i]),
            dimension_numbers=('NCHW', 'OIHW', 'NCHW'),
            precision=hi) + p['in_b'][i][None, :, None, None]
        spec = cond[:, i * 2 * nc:(i + 1) * 2 * nc][:, :, None, :]
        in_act = acts + spec
        gated = jnp.tanh(in_act[:, :nc]) * jax.nn.sigmoid(in_act[:, nc:])
        rs = jnp.einsum('oi,biht->boht', p['rs_w'][i][:, :, 0, 0], gated,
                        precision=hi) + p['rs_b'][i][None, :, None, None]
        if i < N_LAYERS - 1:
            x = x + rs[:, :nc]
            output = output + rs[:, nc:]
        else:
            output = output + rs
    out = jnp.einsum('oi,biht->boht', p['end_w'][:, :, 0, 0], output,
                     precision=hi) + p['end_b'][None, :, None, None]
    return jnp.transpose(out, (1, 0, 2, 3))                              # [2,B,H,T]


# ----------------------------------- main ------------------------------------
if __name__ == "__main__":
    key = jax.random.PRNGKey(0)
    k_audio, k_spect, k_params = jax.random.split(key, 3)
    audio = jax.random.normal(k_audio, (B, N_GROUP, T), jnp.float32)
    spect = jax.random.normal(k_spect, (B, N_COND, T), jnp.float32)
    params = init_params(k_params)

    out = wn2d_forward(audio, spect, params)
    out = jax.block_until_ready(out)
    assert out.shape == (2, B, N_GROUP, T)

    ref = wn2d_reference(audio, spect, params)
    np.testing.assert_allclose(np.asarray(out), np.asarray(ref),
                               rtol=2e-2, atol=2e-2)
    print("KERNEL_OK")
</pallas_src>

<mosaic_0001>
module attributes {stable_mosaic.version = 11 : i64} {
  func.func @wn2d_kernel(%arg0: memref<1x256xf32, #tpu.memory_space<vmem>>, %arg1: memref<8x256xf32, #tpu.memory_space<vmem>>, %arg2: memref<12x1x256xf32, #tpu.memory_space<vmem>>, %arg3: memref<8x1xf32, #tpu.memory_space<vmem>>, %arg4: memref<8x1xf32, #tpu.memory_space<vmem>>, %arg5: memref<32x8xf32, #tpu.memory_space<vmem>>, %arg6: memref<32x1xf32, #tpu.memory_space<vmem>>, %arg7: memref<2x16x48xf32, #tpu.memory_space<vmem>>, %arg8: memref<2x16x8xf32, #tpu.memory_space<vmem>>, %arg9: memref<2x16x1xf32, #tpu.memory_space<vmem>>, %arg10: memref<2x8xf32, #tpu.memory_space<vmem>>, %arg11: memref<2x1xf32, #tpu.memory_space<vmem>>, %arg12: memref<2x256xf32, #tpu.memory_space<vmem>>) attributes {dimension_semantics = [], scalar_prefetch = 0 : i64, scratch_operands = 0 : i64, tpu.core_type = #tpu.core_type<tc>} {
    %c0 = arith.constant 0 : index
    %c0_0 = arith.constant 0 : index
    %0 = vector.load %arg0[%c0, %c0_0] : memref<1x256xf32, #tpu.memory_space<vmem>>, vector<1x256xf32>
    %c0_1 = arith.constant 0 : index
    %c0_2 = arith.constant 0 : index
    %1 = vector.load %arg3[%c0_1, %c0_2] : memref<8x1xf32, #tpu.memory_space<vmem>>, vector<8x1xf32>
    %2 = vector.broadcast %1 : vector<8x1xf32> to vector<8x256xf32>
    %3 = vector.broadcast %0 : vector<1x256xf32> to vector<8x256xf32>
    %4 = arith.mulf %2, %3 : vector<8x256xf32>
    %c0_3 = arith.constant 0 : index
    %c0_4 = arith.constant 0 : index
    %5 = vector.load %arg4[%c0_3, %c0_4] : memref<8x1xf32, #tpu.memory_space<vmem>>, vector<8x1xf32>
    %6 = vector.broadcast %5 : vector<8x1xf32> to vector<8x256xf32>
    %7 = arith.addf %4, %6 : vector<8x256xf32>
    %c0_5 = arith.constant 0 : index
    %c0_6 = arith.constant 0 : index
    %8 = vector.load %arg5[%c0_5, %c0_6] : memref<32x8xf32, #tpu.memory_space<vmem>>, vector<32x8xf32>
    %c0_7 = arith.constant 0 : index
    %c0_8 = arith.constant 0 : index
    %9 = vector.load %arg1[%c0_7, %c0_8] : memref<8x256xf32, #tpu.memory_space<vmem>>, vector<8x256xf32>
    %cst = arith.constant dense<0.000000e+00> : vector<32x256xf32>
    %10 = tpu.matmul %8, %9, %cst {dimension_numbers = #tpu.dot_dimension_numbers<[1], [0], [0], [1], [0, 0, 1, 1], [], []>} : vector<32x8xf32>, vector<8x256xf32>, vector<32x256xf32> -> vector<32x256xf32>
    %c0_9 = arith.constant 0 : index
    %c0_10 = arith.constant 0 : index
    %11 = vector.load %arg6[%c0_9, %c0_10] : memref<32x1xf32, #tpu.memory_space<vmem>>, vector<32x1xf32>
    %12 = vector.broadcast %11 : vector<32x1xf32> to vector<32x256xf32>
    %13 = arith.addf %10, %12 : vector<32x256xf32>
    %c17_i32 = arith.constant 17 : i32
    %14 = tpu.dynamic_rotate %7 by %c17_i32 dim 1 : vector<8x256xf32>, i32 -> vector<8x256xf32>
    %c0_11 = arith.constant 0 : index
    %c0_12 = arith.constant 0 : index
    %c0_13 = arith.constant 0 : index
    %15 = vector.load %arg2[%c0_11, %c0_12, %c0_13] : memref<12x1x256xf32, #tpu.memory_space<vmem>>, vector<1x1x256xf32>
    %16 = vector.shape_cast %15 : vector<1x1x256xf32> to vector<1x256xf32>
    %17 = vector.broadcast %16 : vector<1x256xf32> to vector<8x256xf32>
    %18 = arith.mulf %14, %17 : vector<8x256xf32>
    %c16_i32 = arith.constant 16 : i32
    %19 = tpu.dynamic_rotate %7 by %c16_i32 dim 1 : vector<8x256xf32>, i32 -> vector<8x256xf32>
    %c1 = arith.constant 1 : index
    %c0_14 = arith.constant 0 : index
    %c0_15 = arith.constant 0 : index
    %20 = vector.load %arg2[%c1, %c0_14, %c0_15] : memref<12x1x256xf32, #tpu.memory_space<vmem>>, vector<1x1x256xf32>
    %21 = vector.shape_cast %20 : vector<1x1x256xf32> to vector<1x256xf32>
    %22 = vector.broadcast %21 : vector<1x256xf32> to vector<8x256xf32>
    %23 = arith.mulf %19, %22 : vector<8x256xf32>
    %c15_i32 = arith.constant 15 : i32
    %24 = tpu.dynamic_rotate %7 by %c15_i32 dim 1 : vector<8x256xf32>, i32 -> vector<8x256xf32>
    %c2 = arith.constant 2 : index
    %c0_16 = arith.constant 0 : index
    %c0_17 = arith.constant 0 : index
    %25 = vector.load %arg2[%c2, %c0_16, %c0_17] : memref<12x1x256xf32, #tpu.memory_space<vmem>>, vector<1x1x256xf32>
    %26 = vector.shape_cast %25 : vector<1x1x256xf32> to vector<1x256xf32>
    %27 = vector.broadcast %26 : vector<1x256xf32> to vector<8x256xf32>
    %28 = arith.mulf %24, %27 : vector<8x256xf32>
    %c1_i32 = arith.constant 1 : i32
    %29 = tpu.dynamic_rotate %7 by %c1_i32 dim 1 : vector<8x256xf32>, i32 -> vector<8x256xf32>
    %c3 = arith.constant 3 : index
    %c0_18 = arith.constant 0 : index
    %c0_19 = arith.constant 0 : index
    %30 = vector.load %arg2[%c3, %c0_18, %c0_19] : memref<12x1x256xf32, #tpu.memory_space<vmem>>, vector<1x1x256xf32>
    %31 = vector.shape_cast %30 : vector<1x1x256xf32> to vector<1x256xf32>
    %32 = vector.broadcast %31 : vector<1x256xf32> to vector<8x256xf32>
    %33 = arith.mulf %29, %32 : vector<8x256xf32>
    %c255_i32 = arith.constant 255 : i32
    %34 = tpu.dynamic_rotate %7 by %c255_i32 dim 1 : vector<8x256xf32>, i32 -> vector<8x256xf32>
    %c5 = arith.constant 5 : index
    %c0_20 = arith.constant 0 : index
    %c0_21 = arith.constant 0 : index
    %35 = vector.load %arg2[%c5, %c0_20, %c0_21] : memref<12x1x256xf32, #tpu.memory_space<vmem>>, vector<1x1x256xf32>
    %36 = vector.shape_cast %35 : vector<1x1x256xf32> to vector<1x256xf32>
    %37 = vector.broadcast %36 : vector<1x256xf32> to vector<8x256xf32>
    %38 = arith.mulf %34, %37 : vector<8x256xf32>
    %39 = tpu.concatenate %18, %23, %28, %33, %7, %38 in 0 : vector<8x256xf32>, vector<8x256xf32>, vector<8x256xf32>, vector<8x256xf32>, vector<8x256xf32>, vector<8x256xf32> -> vector<48x256xf32>
    %c0_22 = arith.constant 0 : index
    %c0_23 = arith.constant 0 : index
    %c0_24 = arith.constant 0 : index
    %40 = vector.load %arg7[%c0_22, %c0_23, %c0_24] : memref<2x16x48xf32, #tpu.memory_space<vmem>>, vector<1x16x48xf32>
    %41 = vector.shape_cast %40 : vector<1x16x48xf32> to vector<16x48xf32>
    %cst_25 = arith.constant dense<0.000000e+00> : vector<16x256xf32>
    %42 = tpu.matmul %41, %39, %cst_25 {dimension_numbers = #tpu.dot_dimension_numbers<[1], [0], [0], [1], [0, 0, 1, 1], [], []>} : vector<16x48xf32>, vector<48x256xf32>, vector<16x256xf32> -> vector<16x256xf32>
    %43 = vector.extract_strided_slice %13 {offsets = [0, 0], sizes = [16, 256], strides = [1, 1]} : vector<32x256xf32> to vector<16x256xf32>
    %44 = arith.addf %42, %43 : vector<16x256xf32>
    %45 = vector.extract_strided_slice %44 {offsets = [0, 0], sizes = [8, 256], strides = [1, 1]} : vector<16x256xf32> to vector<8x256xf32>
    %46 = math.tanh %45 : vector<8x256xf32>
    %47 = vector.extract_strided_slice %44 {offsets = [8, 0], sizes = [8, 256], strides = [1, 1]} : vector<16x256xf32> to vector<8x256xf32>
    %48 = arith.negf %47 : vector<8x256xf32>
    %49 = math.exp %48 : vector<8x256xf32>
    %cst_26 = arith.constant 1.000000e+00 : f32
    %50 = vector.broadcast %cst_26 : f32 to vector<8x256xf32>
    %51 = arith.addf %50, %49 : vector<8x256xf32>
    %52 = arith.divf %50, %51 : vector<8x256xf32>
    %53 = arith.mulf %46, %52 : vector<8x256xf32>
    %c0_27 = arith.constant 0 : index
    %c0_28 = arith.constant 0 : index
    %c0_29 = arith.constant 0 : index
    %54 = vector.load %arg8[%c0_27, %c0_28, %c0_29] : memref<2x16x8xf32, #tpu.memory_space<vmem>>, vector<1x16x8xf32>
    %55 = vector.shape_cast %54 : vector<1x16x8xf32> to vector<16x8xf32>
    %cst_30 = arith.constant dense<0.000000e+00> : vector<16x256xf32>
    %56 = tpu.matmul %55, %53, %cst_30 {dimension_numbers = #tpu.dot_dimension_numbers<[1], [0], [0], [1], [0, 0, 1, 1], [], []>} : vector<16x8xf32>, vector<8x256xf32>, vector<16x256xf32> -> vector<16x256xf32>
    %c0_31 = arith.constant 0 : index
    %c0_32 = arith.constant 0 : index
    %c0_33 = arith.constant 0 : index
    %57 = vector.load %arg9[%c0_31, %c0_32, %c0_33] : memref<2x16x1xf32, #tpu.memory_space<vmem>>, vector<1x16x1xf32>
    %58 = vector.shape_cast %57 : vector<1x16x1xf32> to vector<16x1xf32>
    %59 = vector.broadcast %58 : vector<16x1xf32> to vector<16x256xf32>
    %60 = arith.addf %56, %59 : vector<16x256xf32>
    %61 = vector.extract_strided_slice %60 {offsets = [0, 0], sizes = [8, 256], strides = [1, 1]} : vector<16x256xf32> to vector<8x256xf32>
    %62 = arith.addf %7, %61 : vector<8x256xf32>
    %63 = vector.extract_strided_slice %60 {offsets = [8, 0], sizes = [8, 256], strides = [1, 1]} : vector<16x256xf32> to vector<8x256xf32>
    %c18_i32 = arith.constant 18 : i32
    %64 = tpu.dynamic_rotate %62 by %c18_i32 dim 1 : vector<8x256xf32>, i32 -> vector<8x256xf32>
    %c6 = arith.constant 6 : index
    %c0_34 = arith.constant 0 : index
    %c0_35 = arith.constant 0 : index
    %65 = vector.load %arg2[%c6, %c0_34, %c0_35] : memref<12x1x256xf32, #tpu.memory_space<vmem>>, vector<1x1x256xf32>
    %66 = vector.shape_cast %65 : vector<1x1x256xf32> to vector<1x256xf32>
    %67 = vector.broadcast %66 : vector<1x256xf32> to vector<8x256xf32>
    %68 = arith.mulf %64, %67 : vector<8x256xf32>
    %c16_i32_36 = arith.constant 16 : i32
    %69 = tpu.dynamic_rotate %62 by %c16_i32_36 dim 1 : vector<8x256xf32>, i32 -> vector<8x256xf32>
    %c7 = arith.constant 7 : index
    %c0_37 = arith.constant 0 : index
    %c0_38 = arith.constant 0 : index
    %70 = vector.load %arg2[%c7, %c0_37, %c0_38] : memref<12x1x256xf32, #tpu.memory_space<vmem>>, vector<1x1x256xf32>
    %71 = vector.shape_cast %70 : vector<1x1x256xf32> to vector<1x256xf32>
    %72 = vector.broadcast %71 : vector<1x256xf32> to vector<8x256xf32>
    %73 = arith.mulf %69, %72 : vector<8x256xf32>
    %c14_i32 = arith.constant 14 : i32
    %74 = tpu.dynamic_rotate %62 by %c14_i32 dim 1 : vector<8x256xf32>, i32 -> vector<8x256xf32>
    %c8 = arith.constant 8 : index
    %c0_39 = arith.constant 0 : index
    %c0_40 = arith.constant 0 : index
    %75 = vector.load %arg2[%c8, %c0_39, %c0_40] : memref<12x1x256xf32, #tpu.memory_space<vmem>>, vector<1x1x256xf32>
    %76 = vector.shape_cast %75 : vector<1x1x256xf32> to vector<1x256xf32>
    %77 = vector.broadcast %76 : vector<1x256xf32> to vector<8x256xf32>
    %78 = arith.mulf %74, %77 : vector<8x256xf32>
    %c2_i32 = arith.constant 2 : i32
    %79 = tpu.dynamic_rotate %62 by %c2_i32 dim 1 : vector<8x256xf32>, i32 -> vector<8x256xf32>
    %c9 = arith.constant 9 : index
    %c0_41 = arith.constant 0 : index
    %c0_42 = arith.constant 0 : index
    %80 = vector.load %arg2[%c9, %c0_41, %c0_42] : memref<12x1x256xf32, #tpu.memory_space<vmem>>, vector<1x1x256xf32>
    %81 = vector.shape_cast %80 : vector<1x1x256xf32> to vector<1x256xf32>
    %82 = vector.broadcast %81 : vector<1x256xf32> to vector<8x256xf32>
    %83 = arith.mulf %79, %82 : vector<8x256xf32>
    %c254_i32 = arith.constant 254 : i32
    %84 = tpu.dynamic_rotate %62 by %c254_i32 dim 1 : vector<8x256xf32>, i32 -> vector<8x256xf32>
    %c11 = arith.constant 11 : index
    %c0_43 = arith.constant 0 : index
    %c0_44 = arith.constant 0 : index
    %85 = vector.load %arg2[%c11, %c0_43, %c0_44] : memref<12x1x256xf32, #tpu.memory_space<vmem>>, vector<1x1x256xf32>
    %86 = vector.shape_cast %85 : vector<1x1x256xf32> to vector<1x256xf32>
    %87 = vector.broadcast %86 : vector<1x256xf32> to vector<8x256xf32>
    %88 = arith.mulf %84, %87 : vector<8x256xf32>
    %89 = tpu.concatenate %68, %73, %78, %83, %62, %88 in 0 : vector<8x256xf32>, vector<8x256xf32>, vector<8x256xf32>, vector<8x256xf32>, vector<8x256xf32>, vector<8x256xf32> -> vector<48x256xf32>
    %c1_45 = arith.constant 1 : index
    %c0_46 = arith.constant 0 : index
    %c0_47 = arith.constant 0 : index
    %90 = vector.load %arg7[%c1_45, %c0_46, %c0_47] : memref<2x16x48xf32, #tpu.memory_space<vmem>>, vector<1x16x48xf32>
    %91 = vector.shape_cast %90 : vector<1x16x48xf32> to vector<16x48xf32>
    %cst_48 = arith.constant dense<0.000000e+00> : vector<16x256xf32>
    %92 = tpu.matmul %91, %89, %cst_48 {dimension_numbers = #tpu.dot_dimension_numbers<[1], [0], [0], [1], [0, 0, 1, 1], [], []>} : vector<16x48xf32>, vector<48x256xf32>, vector<16x256xf32> -> vector<16x256xf32>
    %93 = vector.extract_strided_slice %13 {offsets = [16, 0], sizes = [16, 256], strides = [1, 1]} : vector<32x256xf32> to vector<16x256xf32>
    %94 = arith.addf %92, %93 : vector<16x256xf32>
    %95 = vector.extract_strided_slice %94 {offsets = [0, 0], sizes = [8, 256], strides = [1, 1]} : vector<16x256xf32> to vector<8x256xf32>
    %96 = math.tanh %95 : vector<8x256xf32>
    %97 = vector.extract_strided_slice %94 {offsets = [8, 0], sizes = [8, 256], strides = [1, 1]} : vector<16x256xf32> to vector<8x256xf32>
    %98 = arith.negf %97 : vector<8x256xf32>
    %99 = math.exp %98 : vector<8x256xf32>
    %cst_49 = arith.constant 1.000000e+00 : f32
    %100 = vector.broadcast %cst_49 : f32 to vector<8x256xf32>
    %101 = arith.addf %100, %99 : vector<8x256xf32>
    %102 = arith.divf %100, %101 : vector<8x256xf32>
    %103 = arith.mulf %96, %102 : vector<8x256xf32>
    %c1_50 = arith.constant 1 : index
    %c0_51 = arith.constant 0 : index
    %c0_52 = arith.constant 0 : index
    %104 = vector.load %arg8[%c1_50, %c0_51, %c0_52] : memref<2x16x8xf32, #tpu.memory_space<vmem>>, vector<1x16x8xf32>
    %105 = vector.shape_cast %104 : vector<1x16x8xf32> to vector<16x8xf32>
    %cst_53 = arith.constant dense<0.000000e+00> : vector<16x256xf32>
    %106 = tpu.matmul %105, %103, %cst_53 {dimension_numbers = #tpu.dot_dimension_numbers<[1], [0], [0], [1], [0, 0, 1, 1], [], []>} : vector<16x8xf32>, vector<8x256xf32>, vector<16x256xf32> -> vector<16x256xf32>
    %c1_54 = arith.constant 1 : index
    %c0_55 = arith.constant 0 : index
    %c0_56 = arith.constant 0 : index
    %107 = vector.load %arg9[%c1_54, %c0_55, %c0_56] : memref<2x16x1xf32, #tpu.memory_space<vmem>>, vector<1x16x1xf32>
    %108 = vector.shape_cast %107 : vector<1x16x1xf32> to vector<16x1xf32>
    %109 = vector.broadcast %108 : vector<16x1xf32> to vector<16x256xf32>
    %110 = arith.addf %106, %109 : vector<16x256xf32>
    %111 = vector.extract_strided_slice %110 {offsets = [0, 0], sizes = [8, 256], strides = [1, 1]} : vector<16x256xf32> to vector<8x256xf32>
    %112 = arith.addf %63, %111 : vector<8x256xf32>
    %c0_57 = arith.constant 0 : index
    %c0_58 = arith.constant 0 : index
    %113 = vector.load %arg10[%c0_57, %c0_58] : memref<2x8xf32, #tpu.memory_space<vmem>>, vector<2x8xf32>
    %cst_59 = arith.constant dense<0.000000e+00> : vector<2x256xf32>
    %114 = tpu.matmul %113, %112, %cst_59 {dimension_numbers = #tpu.dot_dimension_numbers<[1], [0], [0], [1], [0, 0, 1, 1], [], []>} : vector<2x8xf32>, vector<8x256xf32>, vector<2x256xf32> -> vector<2x256xf32>
    %c0_60 = arith.constant 0 : index
    %c0_61 = arith.constant 0 : index
    %115 = vector.load %arg11[%c0_60, %c0_61] : memref<2x1xf32, #tpu.memory_space<vmem>>, vector<2x1xf32>
    %116 = vector.broadcast %115 : vector<2x1xf32> to vector<2x256xf32>
    %117 = arith.addf %114, %116 : vector<2x256xf32>
    %c0_62 = arith.constant 0 : index
    %c0_63 = arith.constant 0 : index
    %118 = vector.load %arg12[%c0_62, %c0_63] : memref<2x256xf32, #tpu.memory_space<vmem>>, vector<2x256xf32>
    tpu.vector_store %arg12[%c0_62, %c0_63], %117 {strides = array<i32>} : memref<2x256xf32, #tpu.memory_space<vmem>>, vector<2x256xf32>,
    return
  }
}

</mosaic_0001>

<llo_original>
// kernel: tpu_custom_call.1
$region0: #{tpu_custom_call.1}
  #allocation0 [shape = 'u32[]', space=smem, size = 0x4, offset = 0x4, fixed_abs, tag = 'smem constant byte address 0x4 - core index']
  #allocation1 [shape = 'u32[72,128]{1,0:T(1,128)}', space=vmem, size = 0x9000, scoped, tag = 'internal scratch']
  %s0 = inlined_call_operand.vmem [shape: f32[1,256], index: 0, kind: input, shape index: {}]
  %s1 = inlined_call_operand.vmem [shape: f32[8,256], index: 1, kind: input, shape index: {}]
  %s2 = inlined_call_operand.vmem [shape: f32[12,1,256], index: 2, kind: input, shape index: {}]
  %s3 = inlined_call_operand.vmem [shape: f32[8,1], index: 3, kind: input, shape index: {}]
  %s4 = inlined_call_operand.vmem [shape: f32[8,1], index: 4, kind: input, shape index: {}]
  %s5 = inlined_call_operand.vmem [shape: f32[32,8], index: 5, kind: input, shape index: {}]
  %s6 = inlined_call_operand.vmem [shape: f32[32,1], index: 6, kind: input, shape index: {}]
  %s7 = inlined_call_operand.vmem [shape: f32[2,16,48], index: 7, kind: input, shape index: {}]
  %s8 = inlined_call_operand.vmem [shape: f32[2,16,8], index: 8, kind: input, shape index: {}]
  %s9 = inlined_call_operand.vmem [shape: f32[2,16,1], index: 9, kind: input, shape index: {}]
  %s10 = inlined_call_operand.vmem [shape: f32[2,8], index: 10, kind: input, shape index: {}]
  %s11 = inlined_call_operand.vmem [shape: f32[2,1], index: 11, kind: input, shape index: {}]
  %s12 = inlined_call_operand.hbm [shape: f32[2,256], index: 12, kind: output, shape index: {}]
  %s13 = sld [smem:[#allocation0]]
  $region58: #{tpu_custom_call.1} parent=0
    _
  %s15 = ssub.s32 1, %s13
  %s16 = scalar_select 0, %s15, %s13
  $region1: #{tpu_custom_call.1} parent=0
    #allocation2 [shape = 'u8[2048]{0}', space=vmem, size = 0x800, scoped, tag = 'output window, operand 0, single buffered']
    #allocation3 [shape = 's32[1]{0}', space=sflag, size = 0x4, scoped, tag = 'scoped memory for tpu_custom_call.1']
    %17 = vsyncpa [#allocation3], 0
    // Predicated region
    $region2: #{tpu_custom_call.1} parent=1 // pred_check
      _
    $region3: #{tpu_custom_call.1} parent=1 // pred_check_branch
      %19 = sbr.rel (0) target = $region5
    $region4: #{tpu_custom_call.1} parent=1 // pred_region
      _
    $region5: #{tpu_custom_call.1} parent=1 // pred_fallthru
      _
    // Predicated region
    $region6: #{tpu_custom_call.1} parent=1 // pred_check
      _
    $region7: #{tpu_custom_call.1} parent=1 // pred_check_branch
      %21 = sbr.rel (0) target = $region9
    $region8: #{tpu_custom_call.1} parent=1 // pred_region
      _
    $region9: #{tpu_custom_call.1} parent=1 // pred_fallthru
      _
    // Predicated region
    $region10: #{tpu_custom_call.1} parent=1 // pred_check
      _
    $region11: #{tpu_custom_call.1} parent=1 // pred_check_branch
      %23 = sbr.rel (0) target = $region13
    $region12: #{tpu_custom_call.1} parent=1 // pred_region
      _
    $region13: #{tpu_custom_call.1} parent=1 // pred_fallthru
      _
    // Predicated region
    $region14: #{tpu_custom_call.1} parent=1 // pred_check
      _
    $region15: #{tpu_custom_call.1} parent=1 // pred_check_branch
      %25 = sbr.rel (0) target = $region17
    $region16: #{tpu_custom_call.1} parent=1 // pred_region
      _
    $region17: #{tpu_custom_call.1} parent=1 // pred_fallthru
      _
    // Predicated region
    $region18: #{tpu_custom_call.1} parent=1 // pred_check
      _
    $region19: #{tpu_custom_call.1} parent=1 // pred_check_branch
      %27 = sbr.rel (0) target = $region21
    $region20: #{tpu_custom_call.1} parent=1 // pred_region
      _
    $region21: #{tpu_custom_call.1} parent=1 // pred_fallthru
      _
    // Predicated region
    $region22: #{tpu_custom_call.1} parent=1 // pred_check
      _
    $region23: #{tpu_custom_call.1} parent=1 // pred_check_branch
      %29 = sbr.rel (0) target = $region25
    $region24: #{tpu_custom_call.1} parent=1 // pred_region
      _
    $region25: #{tpu_custom_call.1} parent=1 // pred_fallthru
      _
    // Predicated region
    $region26: #{tpu_custom_call.1} parent=1 // pred_check
      _
    $region27: #{tpu_custom_call.1} parent=1 // pred_check_branch
      %31 = sbr.rel (0) target = $region29
    $region28: #{tpu_custom_call.1} parent=1 // pred_region
      _
    $region29: #{tpu_custom_call.1} parent=1 // pred_fallthru
      _
    // Predicated region
    $region30: #{tpu_custom_call.1} parent=1 // pred_check
      _
    $region31: #{tpu_custom_call.1} parent=1 // pred_check_branch
      %33 = sbr.rel (0) target = $region33
    $region32: #{tpu_custom_call.1} parent=1 // pred_region
      _
    $region33: #{tpu_custom_call.1} parent=1 // pred_fallthru
      _
    // Predicated region
    $region34: #{tpu_custom_call.1} parent=1 // pred_check
      _
    $region35: #{tpu_custom_call.1} parent=1 // pred_check_branch
      %35 = sbr.rel (0) target = $region37
    $region36: #{tpu_custom_call.1} parent=1 // pred_region
      _
    $region37: #{tpu_custom_call.1} parent=1 // pred_fallthru
      _
    // Predicated region
    $region38: #{tpu_custom_call.1} parent=1 // pred_check
      _
    $region39: #{tpu_custom_call.1} parent=1 // pred_check_branch
      %37 = sbr.rel (0) target = $region41
    $region40: #{tpu_custom_call.1} parent=1 // pred_region
      _
    $region41: #{tpu_custom_call.1} parent=1 // pred_fallthru
      _
    // Predicated region
    $region42: #{tpu_custom_call.1} parent=1 // pred_check
      _
    $region43: #{tpu_custom_call.1} parent=1 // pred_check_branch
      %39 = sbr.rel (0) target = $region45
    $region44: #{tpu_custom_call.1} parent=1 // pred_region
      _
    $region45: #{tpu_custom_call.1} parent=1 // pred_fallthru
      _
    // Predicated region
    $region46: #{tpu_custom_call.1} parent=1 // pred_check
      _
    $region47: #{tpu_custom_call.1} parent=1 // pred_check_branch
      %41 = sbr.rel (0) target = $region49
    $region48: #{tpu_custom_call.1} parent=1 // pred_region
      _
    $region49: #{tpu_custom_call.1} parent=1 // pred_fallthru
      _
    %v42 = vld [vmem:[%s0] sm:$0x3]
    %v43 = vld [vmem:[%s3] sm:$0xff]
    %45 = vset.pattern.permute.xlu0 0
    %46 = vperm.xlu0 %45, %v43
    %v47 = vpop.permute.xlu0 %46
    %v50 = vperm.slane %v42, 0
    %v51 = vperm.slane %v42, 1
    %v54 = vmul.f32 %v47, %v50
    %v55 = vmul.f32 %v47, %v51
    %v56 = vld [vmem:[%s4] sm:$0xff]
    %58 = vset.pattern.permute.xlu0 0
    %59 = vperm.xlu0 %58, %v56
    %v60 = vpop.permute.xlu0 %59
    %v62 = vadd.f32 %v54, %v60
    %v63 = vadd.f32 %v55, %v60
    %v64 = vld [vmem:[%s5] sm:$0xff]
    %v65 = vld [vmem:[%s5 + $0x8] sm:$0xff]
    %v66 = vld [vmem:[%s5 + $0x10] sm:$0xff]
    %v67 = vld [vmem:[%s5 + $0x18] sm:$0xff]
    %v68 = vld [vmem:[%s1] sm:$0xff]
    %v69 = vld [vmem:[%s1 + $0x8] sm:$0xff]
    %v70 = vld [vmem:[%s6] sm:$0xff]
    %v71 = vld [vmem:[%s6 + $0x8] sm:$0xff]
    %v72 = vld [vmem:[%s6 + $0x10] sm:$0xff]
    %v73 = vld [vmem:[%s6 + $0x18] sm:$0xff]
    %75 = vset.pattern.permute.xlu0 0
    %76 = vperm.xlu0 %75, %v70
    %v77 = vpop.permute.xlu0 %76
    %80 = vset.pattern.permute.xlu0 0
    %81 = vperm.xlu0 %80, %v71
    %v82 = vpop.permute.xlu0 %81
    %85 = vset.pattern.permute.xlu0 0
    %86 = vperm.xlu0 %85, %v72
    %v87 = vpop.permute.xlu0 %86
    %90 = vset.pattern.permute.xlu0 0
    %91 = vperm.xlu0 %90, %v73
    %v92 = vpop.permute.xlu0 %91
    %vm94 = vcmask 64512
    %v96 = vsel %vm94, %v64, 0
    %v99 = vsel %vm94, %v65, 0
    %v102 = vsel %vm94, %v66, 0
    %v105 = vsel %vm94, %v67, 0
    %107 = vmatpush.msra.mxu0 0.0
    %108 = vmatpush.msra.mxu0 0.0
    %109 = vmatpush.msra.mxu0 0.0
    %110 = vmatpush.msra.mxu0 0.0
    %111 = vmatpush.msra.mxu0 0.0
    %112 = vmatpush.msra.mxu0 0.0
    %113 = vmatpush.msra.mxu0 0.0
    %114 = vmatpush.msra.mxu0 0.0
    %115 = vmatpush.msra.mxu0 0.0
    %116 = vmatpush.msra.mxu0 0.0
    %117 = vmatpush.msra.mxu0 0.0
    %118 = vmatpush.msra.mxu0 0.0
    %119 = vmatpush.msra.mxu0 0.0
    %120 = vmatpush.msra.mxu0 0.0
    %121 = vmatpush.msra.mxu0 0.0
    %122 = vmatpush.msra.mxu0 %v68
    %123 = vmatmul.f32.gmra.mxu0 %v96
    %v124 = vpop.f32.mrf.mxu0
    %v125 = vadd.f32 %v77, %v124
    %126 = vmatmul.f32.gmra.mxu0 %v99
    %v127 = vpop.f32.mrf.mxu0
    %v128 = vadd.f32 %v82, %v127
    %129 = vmatmul.f32.gmra.mxu0 %v102
    %v130 = vpop.f32.mrf.mxu0
    %v131 = vadd.f32 %v87, %v130
    %132 = vmatmul.f32.gmra.mxu0 %v105
    %v133 = vpop.f32.mrf.mxu0
    %v134 = vadd.f32 %v92, %v133
    %135 = vdwg.mxu0
    %136 = vmatpush.msra.mxu0 0.0
    %137 = vmatpush.msra.mxu0 0.0
    %138 = vmatpush.msra.mxu0 0.0
    %139 = vmatpush.msra.mxu0 0.0
    %140 = vmatpush.msra.mxu0 0.0
    %141 = vmatpush.msra.mxu0 0.0
    %142 = vmatpush.msra.mxu0 0.0
    %143 = vmatpush.msra.mxu0 0.0
    %144 = vmatpush.msra.mxu0 0.0
    %145 = vmatpush.msra.mxu0 0.0
    %146 = vmatpush.msra.mxu0 0.0
    %147 = vmatpush.msra.mxu0 0.0
    %148 = vmatpush.msra.mxu0 0.0
    %149 = vmatpush.msra.mxu0 0.0
    %150 = vmatpush.msra.mxu0 0.0
    %151 = vmatpush.msra.mxu0 %v69
    %152 = vmatmul.f32.gmra.mxu0 %v96
    %v153 = vpop.f32.mrf.mxu0
    %v154 = vadd.f32 %v77, %v153
    %155 = vmatmul.f32.gmra.mxu0 %v99
    %v156 = vpop.f32.mrf.mxu0
    %v157 = vadd.f32 %v82, %v156
    %158 = vmatmul.f32.gmra.mxu0 %v102
    %v159 = vpop.f32.mrf.mxu0
    %v160 = vadd.f32 %v87, %v159
    %161 = vmatmul.f32.gmra.mxu0 %v105
    %v162 = vpop.f32.mrf.mxu0
    %v163 = vadd.f32 %v92, %v162
    %164 = vdwg.mxu0
    %165 = vrot.lane.b32.xlu0 %v62, 17
    %v166 = vpop.permute.xlu0 %165
    %167 = vrot.lane.b32.xlu0 %v63, 17
    %v168 = vpop.permute.xlu0 %167
    %v169 = vlaneseq
    %v170 = vand.u32 %v169, 127
    %vm171 = vcmp.lt.s32.totalorder %v170, 17
    %v172 = vsel %vm171, %v166, %v168
    %v173 = vsel %vm171, %v168, %v166
    %v174 = vld [vmem:[%s2] sm:$0x3]
    %v176 = vperm.slane %v174, 0
    %v177 = vperm.slane %v174, 1
    %v180 = vmul.f32 %v173, %v176
    %v181 = vmul.f32 %v172, %v177
    %182 = vrot.lane.b32.xlu0 %v62, 16
    %v183 = vpop.permute.xlu0 %182
    %184 = vrot.lane.b32.xlu0 %v63, 16
    %v185 = vpop.permute.xlu0 %184
    %vm186 = vcmp.lt.s32.totalorder %v170, 16
    %v187 = vsel %vm186, %v183, %v185
    %v188 = vsel %vm186, %v185, %v183
    %s189 = scalar_lea.vmem %s2, 2
    %v190 = vld [vmem:[%s189] sm:$0x3]
    %v192 = vperm.slane %v190, 0
    %v193 = vperm.slane %v190, 1
    %v196 = vmul.f32 %v188, %v192
    %v197 = vmul.f32 %v187, %v193
    %198 = vrot.lane.b32.xlu0 %v62, 15
    %v199 = vpop.permute.xlu0 %198
    %200 = vrot.lane.b32.xlu0 %v63, 15
    %v201 = vpop.permute.xlu0 %200
    %vm202 = vcmp.lt.s32.totalorder %v170, 15
    %v203 = vsel %vm202, %v199, %v201
    %v204 = vsel %vm202, %v201, %v199
    %s205 = scalar_lea.vmem %s2, 4
    %v206 = vld [vmem:[%s205] sm:$0x3]
    %v208 = vperm.slane %v206, 0
    %v209 = vperm.slane %v206, 1
    %v212 = vmul.f32 %v204, %v208
    %v213 = vmul.f32 %v203, %v209
    %214 = vrot.lane.b32.xlu0 %v62, 1
    %v215 = vpop.permute.xlu0 %214
    %216 = vrot.lane.b32.xlu0 %v63, 1
    %v217 = vpop.permute.xlu0 %216
    %vm218 = vcmp.lt.s32.totalorder %v170, 1
    %v219 = vsel %vm218, %v215, %v217
    %v220 = vsel %vm218, %v217, %v215
    %s221 = scalar_lea.vmem %s2, 6
    %v222 = vld [vmem:[%s221] sm:$0x3]
    %v224 = vperm.slane %v222, 0
    %v225 = vperm.slane %v222, 1
    %v228 = vmul.f32 %v220, %v224
    %v229 = vmul.f32 %v219, %v225
    %230 = vrot.lane.b32.xlu0 %v62, 127
    %v231 = vpop.permute.xlu0 %230
    %232 = vrot.lane.b32.xlu0 %v63, 127
    %v233 = vpop.permute.xlu0 %232
    %vm234 = vcmp.lt.s32.totalorder %v170, 127
    %v235 = vsel %vm234, %v231, %v233
    %v236 = vsel %vm234, %v233, %v231
    %s237 = scalar_lea.vmem %s2, 10
    %v238 = vld [vmem:[%s237] sm:$0x3]
    %v240 = vperm.slane %v238, 0
    %v241 = vperm.slane %v238, 1
    %v244 = vmul.f32 %v235, %v240
    %v245 = vmul.f32 %v236, %v241
    %v246 = vld [vmem:[%s7] sm:$0xff]
    %v247 = vld [vmem:[%s7 + $0x8] sm:$0xff]
    %vm248 = vcmask 392192
    %v250 = vsel %vm248, %v246, 0
    %v253 = vsel %vm248, %v247, 0
    %255 = vmatpush.msra.mxu0 0.0
    %256 = vmatpush.msra.mxu0 0.0
    %257 = vmatpush.msra.mxu0 0.0
    %258 = vmatpush.msra.mxu0 0.0
    %259 = vmatpush.msra.mxu0 0.0
    %260 = vmatpush.msra.mxu0 0.0
    %261 = vmatpush.msra.mxu0 0.0
    %262 = vmatpush.msra.mxu0 0.0
    %263 = vmatpush.msra.mxu0 0.0
    %264 = vmatpush.msra.mxu0 0.0
    %265 = vmatpush.msra.mxu0 %v244
    %266 = vmatpush.msra.mxu0 %v62
    %267 = vmatpush.msra.mxu0 %v228
    %268 = vmatpush.msra.mxu0 %v212
    %269 = vmatpush.msra.mxu0 %v196
    %270 = vmatpush.msra.mxu0 %v180
    %271 = vmatmul.f32.gmra.mxu0 %v250
    %v272 = vpop.f32.mrf.mxu0
    %v273 = vadd.f32 %v125, %v272
    %274 = vmatmul.f32.gmra.mxu0 %v253
    %v275 = vpop.f32.mrf.mxu0
    %v276 = vadd.f32 %v128, %v275
    %277 = vdwg.mxu0
    %278 = vmatpush.msra.mxu0 0.0
    %279 = vmatpush.msra.mxu0 0.0
    %280 = vmatpush.msra.mxu0 0.0
    %281 = vmatpush.msra.mxu0 0.0
    %282 = vmatpush.msra.mxu0 0.0
    %283 = vmatpush.msra.mxu0 0.0
    %284 = vmatpush.msra.mxu0 0.0
    %285 = vmatpush.msra.mxu0 0.0
    %286 = vmatpush.msra.mxu0 0.0
    %287 = vmatpush.msra.mxu0 0.0
    %288 = vmatpush.msra.mxu0 %v245
    %289 = vmatpush.msra.mxu0 %v63
    %290 = vmatpush.msra.mxu0 %v229
    %291 = vmatpush.msra.mxu0 %v213
    %292 = vmatpush.msra.mxu0 %v197
    %293 = vmatpush.msra.mxu0 %v181
    %294 = vmatmul.f32.gmra.mxu0 %v250
    %v295 = vpop.f32.mrf.mxu0
    %v296 = vadd.f32 %v154, %v295
    %297 = vmatmul.f32.gmra.mxu0 %v253
    %v298 = vpop.f32.mrf.mxu0
    %v299 = vadd.f32 %v157, %v298
    %300 = vdwg.mxu0
    %v301 = vtanh.pop %v273
    %v302 = vtanh.pop %v296
    %v303 = vxor.u32 %v276, 2147483648
    %v304 = vxor.u32 %v299, 2147483648
    %v305 = vmul.f32 %v303, 1.442695
    %v306 = vpow.pop %v305
    %v307 = vmul.f32 %v304, 1.442695
    %v308 = vpow.pop %v307
    %v309 = vadd.f32 %v306, 1.0
    %v310 = vadd.f32 %v308, 1.0
    %v311 = vrcp.pop %v309
    %v312 = vmul.f32 %v309, %v311
    %v313 = vsub.f32 1.0, %v312
    %v314 = vmul.f32 %v311, %v313
    %v315 = vadd.f32 %v311, %v314
    %vm316 = vweird.f32 %v309
    %vm317 = vweird.f32 %v311
    %vm318 = vmor %vm316, %vm317
    %v319 = vsel %vm318, %v311, %v315
    %v320 = vand.u32 2147483647, %v309
    %vm321 = vcmp.eq.f32.partialorder %v320, 8.507059e+37
    %v322 = vand.u32 %v309, 2147483648
    %v323 = vor.u32 1.1754944e-38, %v322
    %v324 = vsel %vm321, %v323, %v319
    %v325 = vmul.f32 1.0, %v324
    %v326 = vrcp.pop %v310
    %v327 = vmul.f32 %v310, %v326
    %v328 = vsub.f32 1.0, %v327
    %v329 = vmul.f32 %v326, %v328
    %v330 = vadd.f32 %v326, %v329
    %vm331 = vweird.f32 %v310
    %vm332 = vweird.f32 %v326
    %vm333 = vmor %vm331, %vm332
    %v334 = vsel %vm333, %v326, %v330
    %v335 = vand.u32 2147483647, %v310
    %vm336 = vcmp.eq.f32.partialorder %v335, 8.507059e+37
    %v337 = vand.u32 %v310, 2147483648
    %v338 = vor.u32 1.1754944e-38, %v337
    %v339 = vsel %vm336, %v338, %v334
    %v340 = vmul.f32 1.0, %v339
    %v341 = vmul.f32 %v301, %v325
    %v342 = vmul.f32 %v302, %v340
    %v343 = vld [vmem:[%s8] sm:$0xff]
    %v344 = vld [vmem:[%s8 + $0x8] sm:$0xff]
    %v345 = vld [vmem:[%s9] sm:$0xff]
    %v346 = vld [vmem:[%s9 + $0x8] sm:$0xff]
    %348 = vset.pattern.permute.xlu0 0
    %349 = vperm.xlu0 %348, %v345
    %v350 = vpop.permute.xlu0 %349
    %353 = vset.pattern.permute.xlu0 0
    %354 = vperm.xlu0 %353, %v346
    %v355 = vpop.permute.xlu0 %354
    %v358 = vsel %vm94, %v343, 0
    %v361 = vsel %vm94, %v344, 0
    %363 = vmatpush.msra.mxu0 0.0
    %364 = vmatpush.msra.mxu0 0.0
    %365 = vmatpush.msra.mxu0 0.0
    %366 = vmatpush.msra.mxu0 0.0
    %367 = vmatpush.msra.mxu0 0.0
    %368 = vmatpush.msra.mxu0 0.0
    %369 = vmatpush.msra.mxu0 0.0
    %370 = vmatpush.msra.mxu0 0.0
    %371 = vmatpush.msra.mxu0 0.0
    %372 = vmatpush.msra.mxu0 0.0
    %373 = vmatpush.msra.mxu0 0.0
    %374 = vmatpush.msra.mxu0 0.0
    %375 = vmatpush.msra.mxu0 0.0
    %376 = vmatpush.msra.mxu0 0.0
    %377 = vmatpush.msra.mxu0 0.0
    %378 = vmatpush.msra.mxu0 %v341
    %379 = vmatmul.f32.gmra.mxu0 %v358
    %v380 = vpop.f32.mrf.mxu0
    %v381 = vadd.f32 %v350, %v380
    %382 = vmatmul.f32.gmra.mxu0 %v361
    %v383 = vpop.f32.mrf.mxu0
    %v384 = vadd.f32 %v355, %v383
    %385 = vdwg.mxu0
    %386 = vmatpush.msra.mxu0 0.0
    %387 = vmatpush.msra.mxu0 0.0
    %388 = vmatpush.msra.mxu0 0.0
    %389 = vmatpush.msra.mxu0 0.0
    %390 = vmatpush.msra.mxu0 0.0
    %391 = vmatpush.msra.mxu0 0.0
    %392 = vmatpush.msra.mxu0 0.0
    %393 = vmatpush.msra.mxu0 0.0
    %394 = vmatpush.msra.mxu0 0.0
    %395 = vmatpush.msra.mxu0 0.0
    %396 = vmatpush.msra.mxu0 0.0
    %397 = vmatpush.msra.mxu0 0.0
    %398 = vmatpush.msra.mxu0 0.0
    %399 = vmatpush.msra.mxu0 0.0
    %400 = vmatpush.msra.mxu0 0.0
    %401 = vmatpush.msra.mxu0 %v342
    %402 = vmatmul.f32.gmra.mxu0 %v358
    %v403 = vpop.f32.mrf.mxu0
    %v404 = vadd.f32 %v350, %v403
    %405 = vmatmul.f32.gmra.mxu0 %v361
    %v406 = vpop.f32.mrf.mxu0
    %v407 = vadd.f32 %v355, %v406
    %408 = vdwg.mxu0
    %v409 = vadd.f32 %v62, %v381
    %v410 = vadd.f32 %v63, %v404
    %411 = vrot.lane.b32.xlu0 %v409, 18
    %v412 = vpop.permute.xlu0 %411
    %413 = vrot.lane.b32.xlu0 %v410, 18
    %v414 = vpop.permute.xlu0 %413
    %vm415 = vcmp.lt.s32.totalorder %v170, 18
    %v416 = vsel %vm415, %v412, %v414
    %v417 = vsel %vm415, %v414, %v412
    %s418 = scalar_lea.vmem %s2, 12
    %v419 = vld [vmem:[%s418] sm:$0x3]
    %v421 = vperm.slane %v419, 0
    %v422 = vperm.slane %v419, 1
    %v425 = vmul.f32 %v417, %v421
    %v426 = vmul.f32 %v416, %v422
    %427 = vrot.lane.b32.xlu0 %v409, 16
    %v428 = vpop.permute.xlu0 %427
    %429 = vrot.lane.b32.xlu0 %v410, 16
    %v430 = vpop.permute.xlu0 %429
    %v431 = vsel %vm186, %v428, %v430
    %v432 = vsel %vm186, %v430, %v428
    %s433 = scalar_lea.vmem %s2, 14
    %v434 = vld [vmem:[%s433] sm:$0x3]
    %v436 = vperm.slane %v434, 0
    %v437 = vperm.slane %v434, 1
    %v440 = vmul.f32 %v432, %v436
    %v441 = vmul.f32 %v431, %v437
    %442 = vrot.lane.b32.xlu0 %v409, 14
    %v443 = vpop.permute.xlu0 %442
    %444 = vrot.lane.b32.xlu0 %v410, 14
    %v445 = vpop.permute.xlu0 %444
    %vm446 = vcmp.lt.s32.totalorder %v170, 14
    %v447 = vsel %vm446, %v443, %v445
    %v448 = vsel %vm446, %v445, %v443
    %s449 = scalar_lea.vmem %s2, 16
    %v450 = vld [vmem:[%s449] sm:$0x3]
    %v452 = vperm.slane %v450, 0
    %v453 = vperm.slane %v450, 1
    %v456 = vmul.f32 %v448, %v452
    %v457 = vmul.f32 %v447, %v453
    %458 = vrot.lane.b32.xlu0 %v409, 2
    %v459 = vpop.permute.xlu0 %458
    %460 = vrot.lane.b32.xlu0 %v410, 2
    %v461 = vpop.permute.xlu0 %460
    %vm462 = vcmp.lt.s32.totalorder %v170, 2
    %v463 = vsel %vm462, %v459, %v461
    %v464 = vsel %vm462, %v461, %v459
    %s465 = scalar_lea.vmem %s2, 18
    %v466 = vld [vmem:[%s465] sm:$0x3]
    %v468 = vperm.slane %v466, 0
    %v469 = vperm.slane %v466, 1
    %v472 = vmul.f32 %v464, %v468
    %v473 = vmul.f32 %v463, %v469
    %474 = vrot.lane.b32.xlu0 %v409, 126
    %v475 = vpop.permute.xlu0 %474
    %476 = vrot.lane.b32.xlu0 %v410, 126
    %v477 = vpop.permute.xlu0 %476
    %vm478 = vcmp.lt.s32.totalorder %v170, 126
    %v479 = vsel %vm478, %v475, %v477
    %v480 = vsel %vm478, %v477, %v475
    %s481 = scalar_lea.vmem %s2, 22
    %v482 = vld [vmem:[%s481] sm:$0x3]
    %v484 = vperm.slane %v482, 0
    %v485 = vperm.slane %v482, 1
    %v488 = vmul.f32 %v479, %v484
    %v489 = vmul.f32 %v480, %v485
    %s490 = scalar_lea.vmem %s7, 16
    %v491 = vld [vmem:[%s490] sm:$0xff]
    %v492 = vld [vmem:[%s490 + $0x8] sm:$0xff]
    %v494 = vsel %vm248, %v491, 0
    %v497 = vsel %vm248, %v492, 0
    %499 = vmatpush.msra.mxu0 0.0
    %500 = vmatpush.msra.mxu0 0.0
    %501 = vmatpush.msra.mxu0 0.0
    %502 = vmatpush.msra.mxu0 0.0
    %503 = vmatpush.msra.mxu0 0.0
    %504 = vmatpush.msra.mxu0 0.0
    %505 = vmatpush.msra.mxu0 0.0
    %506 = vmatpush.msra.mxu0 0.0
    %507 = vmatpush.msra.mxu0 0.0
    %508 = vmatpush.msra.mxu0 0.0
    %509 = vmatpush.msra.mxu0 %v488
    %510 = vmatpush.msra.mxu0 %v409
    %511 = vmatpush.msra.mxu0 %v472
    %512 = vmatpush.msra.mxu0 %v456
    %513 = vmatpush.msra.mxu0 %v440
    %514 = vmatpush.msra.mxu0 %v425
    %515 = vmatmul.f32.gmra.mxu0 %v494
    %v516 = vpop.f32.mrf.mxu0
    %v517 = vadd.f32 %v131, %v516
    %518 = vmatmul.f32.gmra.mxu0 %v497
    %v519 = vpop.f32.mrf.mxu0
    %v520 = vadd.f32 %v134, %v519
    %521 = vdwg.mxu0
    %522 = vmatpush.msra.mxu0 0.0
    %523 = vmatpush.msra.mxu0 0.0
    %524 = vmatpush.msra.mxu0 0.0
    %525 = vmatpush.msra.mxu0 0.0
    %526 = vmatpush.msra.mxu0 0.0
    %527 = vmatpush.msra.mxu0 0.0
    %528 = vmatpush.msra.mxu0 0.0
    %529 = vmatpush.msra.mxu0 0.0
    %530 = vmatpush.msra.mxu0 0.0
    %531 = vmatpush.msra.mxu0 0.0
    %532 = vmatpush.msra.mxu0 %v489
    %533 = vmatpush.msra.mxu0 %v410
    %534 = vmatpush.msra.mxu0 %v473
    %535 = vmatpush.msra.mxu0 %v457
    %536 = vmatpush.msra.mxu0 %v441
    %537 = vmatpush.msra.mxu0 %v426
    %538 = vmatmul.f32.gmra.mxu0 %v494
    %v539 = vpop.f32.mrf.mxu0
    %v540 = vadd.f32 %v160, %v539
    %541 = vmatmul.f32.gmra.mxu0 %v497
    %v542 = vpop.f32.mrf.mxu0
    %v543 = vadd.f32 %v163, %v542
    %544 = vdwg.mxu0
    %v545 = vtanh.pop %v517
    %v546 = vtanh.pop %v540
    %v547 = vxor.u32 %v520, 2147483648
    %v548 = vxor.u32 %v543, 2147483648
    %v549 = vmul.f32 %v547, 1.442695
    %v550 = vpow.pop %v549
    %v551 = vmul.f32 %v548, 1.442695
    %v552 = vpow.pop %v551
    %v553 = vadd.f32 %v550, 1.0
    %v554 = vadd.f32 %v552, 1.0
    %v555 = vrcp.pop %v553
    %v556 = vmul.f32 %v553, %v555
    %v557 = vsub.f32 1.0, %v556
    %v558 = vmul.f32 %v555, %v557
    %v559 = vadd.f32 %v555, %v558
    %vm560 = vweird.f32 %v553
    %vm561 = vweird.f32 %v555
    %vm562 = vmor %vm560, %vm561
    %v563 = vsel %vm562, %v555, %v559
    %v564 = vand.u32 2147483647, %v553
    %vm565 = vcmp.eq.f32.partialorder %v564, 8.507059e+37
    %v566 = vand.u32 %v553, 2147483648
    %v567 = vor.u32 1.1754944e-38, %v566
    %v568 = vsel %vm565, %v567, %v563
    %v569 = vmul.f32 1.0, %v568
    %v570 = vrcp.pop %v554
    %v571 = vmul.f32 %v554, %v570
    %v572 = vsub.f32 1.0, %v571
    %v573 = vmul.f32 %v570, %v572
    %v574 = vadd.f32 %v570, %v573
    %vm575 = vweird.f32 %v554
    %vm576 = vweird.f32 %v570
    %vm577 = vmor %vm575, %vm576
    %v578 = vsel %vm577, %v570, %v574
    %v579 = vand.u32 2147483647, %v554
    %vm580 = vcmp.eq.f32.partialorder %v579, 8.507059e+37
    %v581 = vand.u32 %v554, 2147483648
    %v582 = vor.u32 1.1754944e-38, %v581
    %v583 = vsel %vm580, %v582, %v578
    %v584 = vmul.f32 1.0, %v583
    %v585 = vmul.f32 %v545, %v569
    %v586 = vmul.f32 %v546, %v584
    %s587 = scalar_lea.vmem %s8, 16
    %v588 = vld [vmem:[%s587] sm:$0xff]
    %v589 = vld [vmem:[%s587 + $0x8] sm:$0xff]
    %s590 = scalar_lea.vmem %s9, 16
    %v591 = vld [vmem:[%s590] sm:$0xff]
    %v592 = vld [vmem:[%s590 + $0x8] sm:$0xff]
    %594 = vset.pattern.permute.xlu0 0
    %595 = vperm.xlu0 %594, %v591
    %v596 = vpop.permute.xlu0 %595
    %599 = vset.pattern.permute.xlu0 0
    %600 = vperm.xlu0 %599, %v592
    %v601 = vpop.permute.xlu0 %600
    %v603 = vsel %vm94, %v588, 0
    %v606 = vsel %vm94, %v589, 0
    %608 = vmatpush.msra.mxu0 0.0
    %609 = vmatpush.msra.mxu0 0.0
    %610 = vmatpush.msra.mxu0 0.0
    %611 = vmatpush.msra.mxu0 0.0
    %612 = vmatpush.msra.mxu0 0.0
    %613 = vmatpush.msra.mxu0 0.0
    %614 = vmatpush.msra.mxu0 0.0
    %615 = vmatpush.msra.mxu0 0.0
    %616 = vmatpush.msra.mxu0 0.0
    %617 = vmatpush.msra.mxu0 0.0
    %618 = vmatpush.msra.mxu0 0.0
    %619 = vmatpush.msra.mxu0 0.0
    %620 = vmatpush.msra.mxu0 0.0
    %621 = vmatpush.msra.mxu0 0.0
    %622 = vmatpush.msra.mxu0 0.0
    %623 = vmatpush.msra.mxu0 %v585
    %624 = vmatmul.f32.gmra.mxu0 %v603
    %v625 = vpop.f32.mrf.mxu0
    %v626 = vadd.f32 %v596, %v625
    %627 = vmatmul.f32.gmra.mxu0 %v606
    %v628 = vpop.f32.mrf.mxu0
    %629 = vdwg.mxu0
    %630 = vmatpush.msra.mxu0 0.0
    %631 = vmatpush.msra.mxu0 0.0
    %632 = vmatpush.msra.mxu0 0.0
    %633 = vmatpush.msra.mxu0 0.0
    %634 = vmatpush.msra.mxu0 0.0
    %635 = vmatpush.msra.mxu0 0.0
    %636 = vmatpush.msra.mxu0 0.0
    %637 = vmatpush.msra.mxu0 0.0
    %638 = vmatpush.msra.mxu0 0.0
    %639 = vmatpush.msra.mxu0 0.0
    %640 = vmatpush.msra.mxu0 0.0
    %641 = vmatpush.msra.mxu0 0.0
    %642 = vmatpush.msra.mxu0 0.0
    %643 = vmatpush.msra.mxu0 0.0
    %644 = vmatpush.msra.mxu0 0.0
    %645 = vmatpush.msra.mxu0 %v586
    %646 = vmatmul.f32.gmra.mxu0 %v603
    %v647 = vpop.f32.mrf.mxu0
    %v648 = vadd.f32 %v596, %v647
    %649 = vmatmul.f32.gmra.mxu0 %v606
    %v650 = vpop.f32.mrf.mxu0
    %651 = vdwg.mxu0
    %v652 = vadd.f32 %v384, %v626
    %v653 = vadd.f32 %v407, %v648
    %v654 = vld [vmem:[%s10] sm:$0x3]
    %v655 = vld [vmem:[%s11] sm:$0x3]
    %657 = vset.pattern.permute.xlu0 0
    %658 = vperm.xlu0 %657, %v655
    %v659 = vpop.permute.xlu0 %658
    %v662 = vsel %vm94, %v654, 0
    %664 = vmatpush.msra.mxu0 0.0
    %665 = vmatpush.msra.mxu0 0.0
    %666 = vmatpush.msra.mxu0 0.0
    %667 = vmatpush.msra.mxu0 0.0
    %668 = vmatpush.msra.mxu0 0.0
    %669 = vmatpush.msra.mxu0 0.0
    %670 = vmatpush.msra.mxu0 0.0
    %671 = vmatpush.msra.mxu0 0.0
    %672 = vmatpush.msra.mxu0 0.0
    %673 = vmatpush.msra.mxu0 0.0
    %674 = vmatpush.msra.mxu0 0.0
    %675 = vmatpush.msra.mxu0 0.0
    %676 = vmatpush.msra.mxu0 0.0
    %677 = vmatpush.msra.mxu0 0.0
    %678 = vmatpush.msra.mxu0 0.0
    %679 = vmatpush.msra.mxu0 %v652
    %680 = vmatmul.f32.gmra.mxu0 %v662
    %v681 = vpop.f32.mrf.mxu0
    %v682 = vadd.f32 %v659, %v681
    %683 = vdwg.mxu0
    %684 = vmatpush.msra.mxu0 0.0
    %685 = vmatpush.msra.mxu0 0.0
    %686 = vmatpush.msra.mxu0 0.0
    %687 = vmatpush.msra.mxu0 0.0
    %688 = vmatpush.msra.mxu0 0.0
    %689 = vmatpush.msra.mxu0 0.0
    %690 = vmatpush.msra.mxu0 0.0
    %691 = vmatpush.msra.mxu0 0.0
    %692 = vmatpush.msra.mxu0 0.0
    %693 = vmatpush.msra.mxu0 0.0
    %694 = vmatpush.msra.mxu0 0.0
    %695 = vmatpush.msra.mxu0 0.0
    %696 = vmatpush.msra.mxu0 0.0
    %697 = vmatpush.msra.mxu0 0.0
    %698 = vmatpush.msra.mxu0 0.0
    %699 = vmatpush.msra.mxu0 %v653
    %700 = vmatmul.f32.gmra.mxu0 %v662
    %v701 = vpop.f32.mrf.mxu0
    %v702 = vadd.f32 %v659, %v701
    %703 = vdwg.mxu0
    %v706 = vrot.slane %v702, 6
    %vm707 = vcmask 1041408
    %v708 = vsel %vm707, %v682, %v706
    %710 = vst [vmem:[#allocation2] sm:$0xf] %v708
    // Predicated region
    $region50: #{tpu_custom_call.1} parent=1 // pred_check
      _
    $region51: #{tpu_custom_call.1} parent=1 // pred_check_branch
      %712 = sbr.rel (0) target = $region53
    $region52: #{tpu_custom_call.1} parent=1 // pred_region
      %714 = vsyncadd [#allocation3], 0
      %s716 = sshll.u32 [#allocation2], 4
      %s717 = int_to_ptr.vmem [resolvable:$true] %s716
      %s718 = sshll.u32 %s12, 4
      %s719 = int_to_ptr.hbm [resolvable:$true] %s718
      %721 = dma.vmem_to_hbm [thread:$0]  %s717, 64, %s719, [#allocation3]
    $region53: #{tpu_custom_call.1} parent=1 // pred_fallthru
      _
    // Predicated region
    $region54: #{tpu_custom_call.1} parent=1 // pred_check
      _
    $region55: #{tpu_custom_call.1} parent=1 // pred_check_branch
      %723 = sbr.rel (0) target = $region57
    $region56: #{tpu_custom_call.1} parent=1 // pred_region
      %725 = dma.done [#allocation3], 64
    $region57: #{tpu_custom_call.1} parent=1 // pred_fallthru
      _
    %726 = vsyncpa [#allocation3], 1

</llo_original>
